<compile_context>
chip_gen: v7x
topology: tpu7x:2x2x1
jax: 0.10.0
libtpu: 0.0.40
codegen_flags: <defaults>
</compile_context>

<pallas_src>
import math

import jax
import jax.numpy as jnp
from jax import lax
from jax.experimental import pallas as pl
from jax.experimental.pallas import tpu as pltpu


# ----------------------------------------------------------------------------
# PE tables for the lane-dense folded view (seq // k, k * embed).
# Lane d corresponds to original column c = d % embed and an extra sequence-row
# offset r = d // embed.  Original PE[pos, c]:
#   angle = pos / denom(c),  pe = sin(angle) if c even else cos(angle)
# With pos = folded_row * k + r and cos(a) = sin(a + pi/2):
#   pe = sin(folded_row * (k/denom) + (r/denom + parity*pi/2))
# ----------------------------------------------------------------------------
def make_pe_tables(embed_dim: int, lane_fold: int):
    assert embed_dim % 2 == 0, "sinusoidal PE needs an even embed_dim"
    col = jnp.arange(embed_dim, dtype=jnp.int32)
    pair = (col // 2).astype(jnp.float32)
    inv_denom = jnp.exp(-math.log(10000.0) * 2.0 * pair / embed_dim)      # (D,)
    phase = jnp.where(col % 2 == 1,
                      jnp.float32(math.pi / 2.0), jnp.float32(0.0))       # (D,)

    inv_t = jnp.tile(inv_denom, lane_fold)                                 # (W,)
    phase_t = jnp.tile(phase, lane_fold)                                   # (W,)
    rowoff = jnp.repeat(jnp.arange(lane_fold, dtype=jnp.float32),
                        embed_dim)                                         # (W,)

    scaled_freq = (float(lane_fold) * inv_t)[None, :]                      # (1, W)
    offs = (rowoff * inv_t + phase_t)[None, :]                             # (1, W)
    return scaled_freq, offs


def _pe_add_kernel(x_ref, sfreq_ref, offs_ref, o_ref):
    rt, w = x_ref.shape
    row0 = pl.program_id(0) * rt
    folded_row = (row0 + lax.broadcasted_iota(jnp.int32, (rt, w), 0)
                  ).astype(jnp.float32)
    angle = folded_row * sfreq_ref[...] + offs_ref[...]
    o_ref[...] = x_ref[...] + jnp.sin(angle).astype(o_ref.dtype)


def _pe_rows(start: int, n: int, embed: int) -> jnp.ndarray:
    """Exact PE table for rows [start, start+n) -- used for tiny remainders."""
    position = (float(start) + jnp.arange(n, dtype=jnp.float32))[:, None]
    i = jnp.arange(0, embed, 2, dtype=jnp.float32)
    denom = jnp.exp(math.log(10000.0) * i / embed)
    pe = jnp.zeros((n, embed), jnp.float32)
    pe = pe.at[:, 0::2].set(jnp.sin(position / denom))
    pe = pe.at[:, 1::2].set(jnp.cos(position / denom))
    return pe


def _pe_add_main(x_main: jnp.ndarray, embed: int, k: int,
                 target_block_bytes: int) -> jnp.ndarray:
    """Lane-dense folded kernel over rows that are a multiple of k."""
    main_seq = x_main.shape[0]
    s2, w = main_seq // k, embed * k
    xf = x_main.reshape(s2, w)
    itemsize = jnp.dtype(x_main.dtype).itemsize

    # ---- row tile: biggest multiple-of-8 tile that fits the block budget ----
    cap = max(8, (target_block_bytes // (w * itemsize)) // 8 * 8)
    if s2 < 8:
        row_tile = s2                            # tiny input: one full-extent block
    else:
        row_tile = min(cap, (s2 // 8) * 8)       # no exact-divisor requirement
        # Ensure >= 4 grid steps when possible so v7x's two TensorCores both
        # get work (and DMA/compute/writeback overlap on all generations).
        min_steps = 4
        if s2 >= min_steps * 8:
            per_step = max(8, ((s2 + min_steps - 1) // min_steps) // 8 * 8)
            row_tile = min(row_tile, per_step)
    grid = (pl.cdiv(s2, row_tile),)

    block_bytes = row_tile * w * itemsize
    # in + out blocks, each double-buffered, plus tables/headroom; safe on
    # v5e/v6e (128 MiB physical VMEM) and v7x (64 MiB).
    vmem_limit = int(min(48 << 20, max(32 << 20, 4 * block_bytes + (8 << 20))))

    scaled_freq, offs = make_pe_tables(embed, k)

    x_spec = pl.BlockSpec((row_tile, w), lambda i: (i, 0))
    tbl_spec = pl.BlockSpec((1, w), lambda i: (0, 0))    # resident in VMEM

    # NOTE: if the caller can donate x, input_output_aliases={0: 0} would save
    # the separate output allocation; left off since donation isn't guaranteed.
    return pl.pallas_call(
        _pe_add_kernel,
        out_shape=jax.ShapeDtypeStruct((s2, w), x_main.dtype),
        grid=grid,
        in_specs=[x_spec, tbl_spec, tbl_spec],
        out_specs=x_spec,
        compiler_params=pltpu.CompilerParams(
            dimension_semantics=("parallel",),
            vmem_limit_bytes=vmem_limit),
    )(xf, scaled_freq, offs).reshape(main_seq, embed)


def positional_encoding_forward(x: jnp.ndarray,
                                *,
                                target_block_bytes: int = 8 * 1024 * 1024
                                ) -> jnp.ndarray:
    """out = x + sinusoidal_pe, x of shape (input_dim, embed_dim)."""
    seq, embed = x.shape
    assert embed % 2 == 0, "sinusoidal PE needs an even embed_dim"

    # ---- lane-dense fold factor: make the folded last dim a multiple of 128 --
    if embed % 128 == 0:
        k = 1
    else:
        k = math.lcm(embed, 128) // embed

    main_seq = (seq // k) * k
    pieces = []
    if main_seq > 0:
        xm = x if main_seq == seq else x[:main_seq]
        pieces.append(_pe_add_main(xm, embed, k, target_block_bytes))
    rem = seq - main_seq
    if rem > 0:
        # Tiny remainder (< k rows): plain XLA add keeps the bulk lane-dense.
        pe_rem = _pe_rows(main_seq, rem, embed).astype(x.dtype)
        pieces.append(x[main_seq:] + pe_rem)

    return pieces[0] if len(pieces) == 1 else jnp.concatenate(pieces, axis=0)


if __name__ == "__main__":
    def reference(x):
        seq, embed = x.shape
        position = jnp.arange(seq, dtype=jnp.float32)[:, None]
        i = jnp.arange(0, embed, 2, dtype=jnp.float32)
        denom = jnp.exp(math.log(10000.0) * i / embed)
        pe = jnp.zeros((seq, embed), jnp.float32)
        pe = pe.at[:, 0::2].set(jnp.sin(position / denom))
        pe = pe.at[:, 1::2].set(jnp.cos(position / denom))
        return x + pe

    key = jax.random.PRNGKey(0)

    # Primary case (matches the module docstring): embed_dim=32, input_dim=16.
    x = jax.random.normal(key, (16, 32), dtype=jnp.float32)
    out = positional_encoding_forward(x)
    jax.block_until_ready(out)
    assert jnp.allclose(out, reference(x), atol=1e-5, rtol=1e-5), "mismatch (16,32)"

    # Remainder-rows path (seq not a multiple of the lane-fold factor).
    x2 = jax.random.normal(jax.random.PRNGKey(1), (10, 32), dtype=jnp.float32)
    out2 = positional_encoding_forward(x2)
    jax.block_until_ready(out2)
    assert jnp.allclose(out2, reference(x2), atol=1e-5, rtol=1e-5), "mismatch (10,32)"

    # Already lane-dense (k=1) with a masked trailing partial row block.
    x3 = jax.random.normal(jax.random.PRNGKey(2), (24, 128), dtype=jnp.float32)
    out3 = positional_encoding_forward(x3)
    jax.block_until_ready(out3)
    assert jnp.allclose(out3, reference(x3), atol=1e-5, rtol=1e-5), "mismatch (24,128)"

    print("KERNEL_OK")
</pallas_src>

<mosaic_0001>
module attributes {stable_mosaic.version = 11 : i64} {
  func.func @_pe_add_kernel(%arg0: i32, %arg1: memref<4x128xf32, #tpu.memory_space<vmem>>, %arg2: memref<1x128xf32, #tpu.memory_space<vmem>>, %arg3: memref<1x128xf32, #tpu.memory_space<vmem>>, %arg4: memref<4x128xf32, #tpu.memory_space<vmem>>) attributes {dimension_semantics = [#tpu.dimension_semantics<parallel>], iteration_bounds = array<i64: 1>, scalar_prefetch = 0 : i64, scratch_operands = 0 : i64, tpu.core_type = #tpu.core_type<tc>, window_params = [{transform_indices = @transform_0, window_bounds = array<i64: 4, 128>}, {pipeline_mode = #tpu.pipeline_mode<synchronous>, transform_indices = @transform_1, window_bounds = array<i64: 1, 128>}, {pipeline_mode = #tpu.pipeline_mode<synchronous>, transform_indices = @transform_2, window_bounds = array<i64: 1, 128>}, {transform_indices = @transform_3, window_bounds = array<i64: 4, 128>}]} {
    %c4_i32 = arith.constant 4 : i32
    %0 = arith.muli %arg0, %c4_i32 : i32
    %1 = tpu.iota {dimensions = array<i32: 0>} : vector<4x128xi32>
    %2 = vector.broadcast %0 : i32 to vector<4x128xi32>
    %3 = arith.addi %2, %1 : vector<4x128xi32>
    %4 = arith.sitofp %3 : vector<4x128xi32> to vector<4x128xf32>
    %c0 = arith.constant 0 : index
    %c0_0 = arith.constant 0 : index
    %5 = vector.load %arg2[%c0, %c0_0] : memref<1x128xf32, #tpu.memory_space<vmem>>, vector<1x128xf32>
    %6 = vector.broadcast %5 : vector<1x128xf32> to vector<4x128xf32>
    %7 = arith.mulf %4, %6 : vector<4x128xf32>
    %c0_1 = arith.constant 0 : index
    %c0_2 = arith.constant 0 : index
    %8 = vector.load %arg3[%c0_1, %c0_2] : memref<1x128xf32, #tpu.memory_space<vmem>>, vector<1x128xf32>
    %9 = vector.broadcast %8 : vector<1x128xf32> to vector<4x128xf32>
    %10 = arith.addf %7, %9 : vector<4x128xf32>
    %c0_3 = arith.constant 0 : index
    %c0_4 = arith.constant 0 : index
    %11 = vector.load %arg1[%c0_3, %c0_4] : memref<4x128xf32, #tpu.memory_space<vmem>>, vector<4x128xf32>
    %12 = math.sin %10 : vector<4x128xf32>
    %13 = arith.addf %11, %12 : vector<4x128xf32>
    %c0_5 = arith.constant 0 : index
    %c0_6 = arith.constant 0 : index
    %14 = vector.load %arg4[%c0_5, %c0_6] : memref<4x128xf32, #tpu.memory_space<vmem>>, vector<4x128xf32>
    tpu.vector_store %arg4[%c0_5, %c0_6], %13 {strides = array<i32>} : memref<4x128xf32, #tpu.memory_space<vmem>>, vector<4x128xf32>,
    return
  }
  func.func @transform_0(%arg0: i32) -> (i32, i32) {
    %c0_i32 = arith.constant 0 : i32
    %c0_i32_0 = arith.constant 0 : i32
    return %arg0, %c0_i32 : i32, i32
  }
  func.func @transform_1(%arg0: i32) -> (i32, i32) {
    %c0_i32 = arith.constant 0 : i32
    %c0_i32_0 = arith.constant 0 : i32
    %c0_i32_1 = arith.constant 0 : i32
    return %c0_i32, %c0_i32_0 : i32, i32
  }
  func.func @transform_2(%arg0: i32) -> (i32, i32) {
    %c0_i32 = arith.constant 0 : i32
    %c0_i32_0 = arith.constant 0 : i32
    %c0_i32_1 = arith.constant 0 : i32
    return %c0_i32, %c0_i32_0 : i32, i32
  }
  func.func @transform_3(%arg0: i32) -> (i32, i32) {
    %c0_i32 = arith.constant 0 : i32
    %c0_i32_0 = arith.constant 0 : i32
    return %arg0, %c0_i32 : i32, i32
  }
}

</mosaic_0001>

<llo_original>
// kernel: tpu_custom_call.1
$region0: #{tpu_custom_call.1}
  #allocation0 [shape = 'u32[]', space=smem, size = 0x4, offset = 0x4, fixed_abs, tag = 'smem constant byte address 0x4 - core index']
  #allocation1 [shape = 'u32[144,128]{1,0:T(1,128)}', space=vmem, size = 0x12000, scoped, tag = 'internal scratch']
  %s0 = inlined_call_operand.hbm [shape: f32[4,128], index: 0, kind: input, shape index: {}]
  %s1 = inlined_call_operand.vmem [shape: f32[1,128], index: 1, kind: input, shape index: {}]
  %s2 = inlined_call_operand.vmem [shape: f32[1,128], index: 2, kind: input, shape index: {}]
  %s3 = inlined_call_operand.hbm [shape: f32[4,128], index: 3, kind: output, shape index: {}]
  %s4 = sld [smem:[#allocation0]]
  $region26: #{tpu_custom_call.1} parent=0
    _
  %s6 = ssub.s32 1, %s4
  %s7 = scalar_select 0, %s6, %s4
  $region1: #{tpu_custom_call.1} parent=0
    #allocation2 [shape = 'u8[2048]{0}', space=vmem, size = 0x800, scoped, tag = 'input window, operand 0, single buffered']
    #allocation3 [shape = 's32[1]{0}', space=sflag, size = 0x4, scoped, tag = 'scoped memory for tpu_custom_call.1']
    #allocation4 [shape = 's32[1]{0}', space=sflag, size = 0x4, scoped, tag = 'scoped memory for tpu_custom_call.1']
    #allocation5 [shape = 'u8[2048]{0}', space=vmem, size = 0x800, scoped, tag = 'output window, operand 0, single buffered']
    %8 = vsyncpa [#allocation3], 0
    %9 = vsyncpa [#allocation4], 0
    // Predicated region
    $region2: #{tpu_custom_call.1} parent=1 // pred_check
      _
    $region3: #{tpu_custom_call.1} parent=1 // pred_check_branch
      %11 = sbr.rel (0) target = $region5
    $region4: #{tpu_custom_call.1} parent=1 // pred_region
      %s13 = ssub.s32 64, 64
      %14 = vsyncadd [#allocation3], %s13
      %s16 = sshll.u32 [#allocation2], 4
      %s17 = int_to_ptr.vmem [resolvable:$true] %s16
      %19 = dma.hbm_to_vmem [thread:$0]  %s0, 64, %s17, [#allocation3]
    $region5: #{tpu_custom_call.1} parent=1 // pred_fallthru
      _
    // Predicated region
    $region6: #{tpu_custom_call.1} parent=1 // pred_check
      _
    $region7: #{tpu_custom_call.1} parent=1 // pred_check_branch
      %21 = sbr.rel (0) target = $region9
    $region8: #{tpu_custom_call.1} parent=1 // pred_region
      _
    $region9: #{tpu_custom_call.1} parent=1 // pred_fallthru
      _
    // Predicated region
    $region10: #{tpu_custom_call.1} parent=1 // pred_check
      _
    $region11: #{tpu_custom_call.1} parent=1 // pred_check_branch
      %23 = sbr.rel (0) target = $region13
    $region12: #{tpu_custom_call.1} parent=1 // pred_region
      _
    $region13: #{tpu_custom_call.1} parent=1 // pred_fallthru
      _
    // Predicated region
    $region14: #{tpu_custom_call.1} parent=1 // pred_check
      _
    $region15: #{tpu_custom_call.1} parent=1 // pred_check_branch
      %25 = sbr.rel (0) target = $region17
    $region16: #{tpu_custom_call.1} parent=1 // pred_region
      %26 = dma.done [#allocation3], 64
    $region17: #{tpu_custom_call.1} parent=1 // pred_fallthru
      _
    %s27 = smul.u32 0, 4
    %v28 = vlaneseq
    %v29 = vshrl.u32 %v28, 7
    %v30 = vstv %s27
    %v31 = vadd.s32 %v30, %v29
    %v32 = vcvt.s32.f32 %v31
    %v33 = vld [vmem:[%s1] sm:$0x1]
    %v35 = vlaneseq
    %v36 = vshrl.u32 %v35, 7
    %v37 = vsub.s32 0, %v36
    %v38 = vrot.slane %v33, %v37
    %v40 = vmul.f32 %v32, %v38
    %v41 = vld [vmem:[%s2] sm:$0x1]
    %v43 = vlaneseq
    %v44 = vshrl.u32 %v43, 7
    %v45 = vsub.s32 0, %v44
    %v46 = vrot.slane %v41, %v45
    %v48 = vadd.f32 %v40, %v46
    %v49 = vld [vmem:[#allocation2] sm:$0xf]
    %v50 = vand.u32 2147483647, %v48
    %vm51 = vcmp.le.f32.partialorder %v50, 0.7853982
    %vm52 = vcmp.lt.s32.totalorder %v48, 0
    %v53 = vand.u32 %v48, 2139095040
    %v54 = vshrl.u32 %v53, 23
    %v55 = vsub.s32 %v54, 127
    %v56 = vand.u32 2147483647, %v48
    %v57 = vand.u32 %v56, 8388607
    %v58 = vor.u32 %v57, 8388608
    %v59 = vsub.s32 0, %v58
    %v60 = vadd.s32 %v55, 1
    %vm61 = vcmp.gt.s32.totalorder %v60, 0
    %v62 = vsel %vm61, %v60, 0
    %v63 = vshrl.u32 %v62, 5
    %v64 = vand.u32 %v62, 31
    %v65 = vsub.s32 32, %v64
    %v66 = vshrl.u32 683565275, %v65
    %v67 = vshll.u32 683565275, %v64
    %v68 = vshrl.u32 2475754826, %v65
    %v69 = vor.u32 %v67, %v68
    %v70 = vshll.u32 2475754826, %v64
    %v71 = vshrl.u32 2131351028, %v65
    %v72 = vor.u32 %v70, %v71
    %v73 = vshll.u32 2131351028, %v64
    %v74 = vshrl.u32 2102212464, %v65
    %v75 = vor.u32 %v73, %v74
    %v76 = vshll.u32 2102212464, %v64
    %v77 = vshrl.u32 920167782, %v65
    %v78 = vor.u32 %v76, %v77
    %v79 = vshll.u32 920167782, %v64
    %v80 = vshrl.u32 1326507024, %v65
    %v81 = vor.u32 %v79, %v80
    %vm82 = vcmp.lt.s32.totalorder %v63, 1
    %vm83 = vcmp.lt.s32.totalorder %v63, 2
    %vm84 = vcmp.lt.s32.totalorder %v63, 3
    %vm85 = vcmp.lt.s32.totalorder %v63, 4
    %v86 = vsel %vm82, %v66, %v69
    %v87 = vsel %vm85, %v75, 2102212464
    %v88 = vsel %vm84, %v72, %v87
    %v89 = vsel %vm83, %v86, %v88
    %v90 = vsel %vm82, %v69, %v72
    %v91 = vsel %vm85, %v78, 920167782
    %v92 = vsel %vm84, %v75, %v91
    %v93 = vsel %vm83, %v90, %v92
    %v94 = vsel %vm82, %v72, %v75
    %v95 = vsel %vm85, %v81, 1326507024
    %v96 = vsel %vm84, %v78, %v95
    %v97 = vsel %vm83, %v94, %v96
    %v98 = vshll.u32 %v58, 8
    %v99 = vmul.u32.u64.compose %v98, %v97
    %v100 = vextract.low.u32 %v99
    %v101 = vextract.high.u32 %v99
    %v102 = vmul.u32.u64.compose %v98, %v93
    %v103 = vextract.low.u32 %v102
    %v104 = vextract.high.u32 %v102
    %v105 = vmul.u32 %v98, %v89
    %v106 = vadd.s32 %v101, %v103
    %vm107 = vc.u32 %v101, %v103
    %v108 = vadd.s32 %v104, 1
    %v109 = vsel %vm107, %v108, %v104
    %v110 = vadd.s32 %v105, %v109
    %v111 = vadd.s32 %v110, 536870912
    %v112 = vshrl.u32 %v111, 30
    %v113 = vshll.u32 %v112, 30
    %v114 = vsub.s32 %v110, %v113
    %vm115 = vcmp.lt.s32.totalorder %v114, 0
    %v116 = vsub.s32 0, %v114
    %v117 = vsel %vm115, %v116, %v114
    %v118 = vclz %v117
    %v119 = vsub.s32 %v118, 2
    %vm120 = vcmp.gt.s32.totalorder 0, %v119
    %v121 = vsel %vm120, 0, %v119
    %v122 = vsub.s32 32, %v121
    %v123 = vshll.u32 %v114, %v121
    %v124 = vshrl.u32 %v106, %v122
    %v125 = vor.u32 %v123, %v124
    %v126 = vsub.s32 4294967266, %v121
    %v127 = vadd.s32 %v126, 127
    %v128 = vshll.u32 %v127, 23
    %v129 = vor.u32 4788187, %v128
    %v130 = vand.u32 2147483647, %v129
    %v132 = vcvt.s32.f32 %v125
    %v133 = vmul.f32 %v132, %v130
    %v134 = vxor.u32 %v133, 2147483648
    %v135 = vsel %vm52, %v134, %v133
    %v136 = vsub.s32 4, %v112
    %v137 = vsel %vm52, %v136, %v112
    %v138 = vsel %vm51, %v48, %v135
    %v139 = vsel %vm51, 0, %v137
    %v140 = vcosq.f32.pop %v138
    %v141 = vsinq.f32.pop %v138
    %vm142 = vweird.f32 %v48
    %v143 = vadd.s32 %v139, 3
    %v144 = vand.u32 %v143, 3
    %vm145 = vcmp.lt.s32.totalorder %v144, 2
    %vm146 = vcmp.eq.s32.totalorder %v144, 0
    %v147 = vxor.u32 %v141, 2147483648
    %v148 = vsel %vm146, %v140, %v147
    %vm149 = vcmp.eq.s32.totalorder %v144, 2
    %v150 = vxor.u32 %v140, 2147483648
    %v151 = vsel %vm149, %v150, %v141
    %v152 = vsel %vm145, %v148, %v151
    %v153 = vsel %vm142, nan, %v152
    %v154 = vadd.f32 %v49, %v153
    %155 = vst [vmem:[#allocation5] sm:$0xf] %v154
    // Predicated region
    $region18: #{tpu_custom_call.1} parent=1 // pred_check
      _
    $region19: #{tpu_custom_call.1} parent=1 // pred_check_branch
      %157 = sbr.rel (0) target = $region21
    $region20: #{tpu_custom_call.1} parent=1 // pred_region
      %s159 = ssub.s32 64, 64
      %160 = vsyncadd [#allocation4], %s159
      %s162 = sshll.u32 [#allocation5], 4
      %s163 = int_to_ptr.vmem [resolvable:$true] %s162
      %165 = dma.vmem_to_hbm [thread:$0]  %s163, 64, %s3, [#allocation4]
    $region21: #{tpu_custom_call.1} parent=1 // pred_fallthru
      _
    // Predicated region
    $region22: #{tpu_custom_call.1} parent=1 // pred_check
      _
    $region23: #{tpu_custom_call.1} parent=1 // pred_check_branch
      %167 = sbr.rel (0) target = $region25
    $region24: #{tpu_custom_call.1} parent=1 // pred_region
      %168 = dma.done [#allocation4], 64
    $region25: #{tpu_custom_call.1} parent=1 // pred_fallthru
      _
    %169 = vsyncpa [#allocation3], 1
    %170 = vsyncpa [#allocation4], 1

</llo_original>
